<compile_context>
chip_gen: v5e
topology: v5e:2x2
jax: 0.10.0
libtpu: 0.0.40
codegen_flags: <defaults>
</compile_context>

<pallas_src>
import jax
import jax.numpy as jnp
from jax.experimental import pallas as pl
from jax.experimental.pallas import tpu as pltpu


_LOGIT_SCALE = 100.0   # hard-coded in CustomPENGI.forward
_EPS = 1e-12           # matches torch F.normalize eps; keeps rsqrt finite
_LANE = 128            # TPU lane width: class axis is padded to a multiple of this


def _round_up(x, m):
    return ((x + m - 1) // m) * m


def pad_class_dim(arr, n_cls_pad):
    """One-time (init-style) zero-pad of a class-major array to the lane-padded width."""
    pad = n_cls_pad - arr.shape[0]
    if pad == 0:
        return arr
    return jnp.pad(arr, ((0, pad),) + ((0, 0),) * (arr.ndim - 1))


# -----------------------------------------------------------------------------
# Kernel 1: PromptLearner branch (session-constant; run once per call, or once
# per session if the caller caches the result).
# -----------------------------------------------------------------------------
def _prompt_kernel(n_active_ref, txt_ref, ctx_ref, lam_ref, out_ref):
    # n_active_ref : SMEM (1,) int32       -- (session+1)*way, runtime scalar
    # txt_ref      : VMEM (n_cls_pad, D)   -- raw text embeddings, all classes
    # ctx_ref      : VMEM (n_cls_pad, D)   -- PromptLearner.ctx parameter
    # lam_ref      : VMEM (n_cls_pad, 1)   -- PromptLearner.lambdas (column-stored)
    # out_ref      : VMEM (n_cls_pad, D)   -- normalized, blended prompts (bf16)
    n_active = n_active_ref[0]

    txt = txt_ref[...].astype(jnp.float32)
    ctx = ctx_ref[...].astype(jnp.float32)
    lam = jax.nn.sigmoid(lam_ref[...].astype(jnp.float32))            # (n_cls_pad, 1)

    txt_sq = jnp.maximum(jnp.sum(txt * txt, axis=-1, keepdims=True), _EPS)
    txt_n = txt * jax.lax.rsqrt(txt_sq)

    upd = txt_n + lam * (ctx - txt_n)            # == (1-lam)*txt_n + lam*ctx
    upd_sq = jnp.maximum(jnp.sum(upd * upd, axis=-1, keepdims=True), _EPS)
    upd_n = upd * jax.lax.rsqrt(upd_sq)

    # Zero the class rows beyond the current session (runtime scalar mask, so
    # shapes -- and hence the compile -- never change across sessions).
    row = jax.lax.broadcasted_iota(jnp.int32, (upd_n.shape[0], 1), 0)
    out_ref[...] = jnp.where(row < n_active, upd_n, 0.0).astype(out_ref.dtype)


def compute_prompts(text_features, session, *, ctx, lambdas, way):
    """Session-constant prompts, (n_cls_pad, D) bf16, rows >= n_active zeroed."""
    n_cls_pad, ctx_dim = ctx.shape
    assert n_cls_pad % _LANE == 0, (
        "pad ctx / lambdas to a multiple of 128 classes at init (pad_class_dim)")
    if text_features.shape[0] != n_cls_pad:      # tiny (n_cls, D) pad if not pre-padded
        text_features = pad_class_dim(text_features, n_cls_pad)

    n_active_arr = jnp.asarray([(session + 1) * way], dtype=jnp.int32)

    grid_spec = pltpu.PrefetchScalarGridSpec(
        num_scalar_prefetch=1,
        grid=(1,),
        in_specs=[
            pl.BlockSpec((n_cls_pad, ctx_dim), lambda i, n: (0, 0)),   # text
            pl.BlockSpec((n_cls_pad, ctx_dim), lambda i, n: (0, 0)),   # ctx
            pl.BlockSpec((n_cls_pad, 1), lambda i, n: (0, 0)),         # lambdas
        ],
        out_specs=pl.BlockSpec((n_cls_pad, ctx_dim), lambda i, n: (0, 0)),
    )
    return pl.pallas_call(
        _prompt_kernel,
        out_shape=jax.ShapeDtypeStruct((n_cls_pad, ctx_dim), jnp.bfloat16),
        grid_spec=grid_spec,
        compiler_params=pltpu.CompilerParams(dimension_semantics=("arbitrary",)),
    )(n_active_arr, text_features, ctx, lambdas)


# -----------------------------------------------------------------------------
# Kernel 2: audio normalize + cosine-similarity logits (per-batch hot loop).
# -----------------------------------------------------------------------------
def _logits_kernel(aud_ref, prm_ref, out_ref):
    # aud_ref : VMEM (tb, D)              -- raw audio embeddings (one batch tile)
    # prm_ref : VMEM (n_cls_pad, D) bf16  -- precomputed prompts (grid-invariant)
    # out_ref : VMEM (tb, n_cls_pad) f32  -- logits tile (lane-dense stores)
    aud = aud_ref[...].astype(jnp.float32)
    aud_sq = jnp.maximum(jnp.sum(aud * aud, axis=-1, keepdims=True), _EPS)
    # Fold the logit scale into the (tb,1) inv-norm column (cheapest place),
    # then feed the MXU bf16 operands (what default precision does anyway).
    aud_n = (aud * (_LOGIT_SCALE * jax.lax.rsqrt(aud_sq))).astype(jnp.bfloat16)

    out_ref[...] = jax.lax.dot_general(
        aud_n, prm_ref[...],
        dimension_numbers=(((1,), (1,)), ((), ())),       # aud @ prompts.T
        preferred_element_type=jnp.float32,
    ).astype(out_ref.dtype)


def custom_pengi_logits(audio_features, text_features, session, *, ctx, lambdas, way):
    """Fused CustomPENGI head: normalize audio, PromptLearner blend, cosine logits.

    audio_features : (B, ctx_dim)           raw (un-normalized) audio embeddings
    text_features  : (n_cls[_pad], ctx_dim) raw text embeddings for ALL classes
    ctx            : (n_cls_pad, ctx_dim)   PromptLearner.ctx, class axis padded to 128
    lambdas        : (n_cls_pad, 1)         PromptLearner.lambdas, column-stored + padded
    Returns logits of shape (B, (session+1)*way), matching the PyTorch module.
    """
    n_cls_pad, ctx_dim = ctx.shape
    B = audio_features.shape[0]
    n_active = (session + 1) * way

    # Session-constant branch: computed once here (cache per session upstream
    # for repeated inference if desired).
    prompts = compute_prompts(text_features, session, ctx=ctx, lambdas=lambdas, way=way)

    # Batch tiling: single full-extent block for small batches (no grid
    # overhead); 512-row "parallel" tiles otherwise (>=2 tiles keeps both v7x
    # TensorCores busy, 512-wide tiles stream HBM at ~85% efficiency). Ragged
    # last block handled by the pl.cdiv grid + eps-clamped norm (no jnp.pad
    # copy of the audio array).
    tb = B if B <= 512 else 512
    grid = (pl.cdiv(B, tb),)

    logits = pl.pallas_call(
        _logits_kernel,
        out_shape=jax.ShapeDtypeStruct((B, n_cls_pad), jnp.float32),
        grid=grid,
        in_specs=[
            pl.BlockSpec((tb, ctx_dim), lambda i: (i, 0)),           # audio tile
            pl.BlockSpec((n_cls_pad, ctx_dim), lambda i: (0, 0)),    # prompts (invariant)
        ],
        out_specs=pl.BlockSpec((tb, n_cls_pad), lambda i: (i, 0)),
        compiler_params=pltpu.CompilerParams(dimension_semantics=("parallel",)),
    )(audio_features, prompts)

    # Match the PyTorch return shape (B, n_active); padded/inactive columns are 0.
    return logits[:, :n_active]


if __name__ == "__main__":
    key = jax.random.PRNGKey(0)
    k_ctx, k_lam, k_txt, k_aud = jax.random.split(key, 4)

    # Small, module-consistent shapes.
    n_cls = 16       # len(args.classnames)
    ctx_dim = 128    # args.ctx_dim
    way = 4          # args.way
    session = 1      # -> n_active = 8 active classes
    n_active = (session + 1) * way
    batch = 2        # audio batch
    n_cls_pad = _round_up(max(n_cls, _LANE), _LANE)   # 128 (lane-dense class axis)

    # Parameters (shapes / init style match PromptLearner.__init__).  lambdas
    # is stored column-shaped so no per-call reshape is needed.
    ctx_param = 0.02 * jax.random.normal(k_ctx, (n_cls, ctx_dim), jnp.float32)
    lambdas_param = jax.random.uniform(k_lam, (n_cls, 1), jnp.float32)

    # TODO(synk): the pretrained PENGI audio/text encoders and the prompt
    # tokenization are not re-implemented; their embedding outputs are inputs.
    text_features = jax.random.normal(k_txt, (n_cls, ctx_dim), jnp.float32)
    audio_features = jax.random.normal(k_aud, (batch, ctx_dim), jnp.float32)

    # One-time (init-style) padding of the class axis to the lane width.
    ctx_pad = pad_class_dim(ctx_param, n_cls_pad)
    lambdas_pad = pad_class_dim(lambdas_param, n_cls_pad)
    text_pad = pad_class_dim(text_features, n_cls_pad)

    out = custom_pengi_logits(audio_features, text_pad, session,
                              ctx=ctx_pad, lambdas=lambdas_pad, way=way)
    out = jax.block_until_ready(out)

    # Pure-JAX reference mirroring the PyTorch module tail (unpadded arrays).
    a_n = audio_features / jnp.linalg.norm(audio_features, axis=-1, keepdims=True)
    t_n = text_features / jnp.linalg.norm(text_features, axis=-1, keepdims=True)
    lam = jax.nn.sigmoid(lambdas_param[:n_active])
    upd = (1.0 - lam) * t_n[:n_active] + lam * ctx_param[:n_active]
    upd = upd / jnp.linalg.norm(upd, axis=-1, keepdims=True)
    ref = _LOGIT_SCALE * (a_n @ upd.T)

    assert out.shape == (batch, n_active), out.shape
    # Tolerance note: the matmul operands are fed to the MXU as bf16 (which is
    # also what default-precision f32 matmuls do), so logits scaled by 100 may
    # differ from the f32 XLA reference by a few 1e-2.
    assert jnp.allclose(out, ref, atol=0.5, rtol=0.02), \
        float(jnp.max(jnp.abs(out - ref)))

    print("KERNEL_OK")
</pallas_src>

<mosaic_0001>
module attributes {stable_mosaic.version = 11 : i64} {
  func.func @_prompt_kernel(%arg0: i32, %arg1: memref<1xi32, #tpu.memory_space<smem>>, %arg2: memref<128x128xf32, #tpu.memory_space<vmem>>, %arg3: memref<128x128xf32, #tpu.memory_space<vmem>>, %arg4: memref<128x1xf32, #tpu.memory_space<vmem>>, %arg5: memref<128x128xbf16, #tpu.memory_space<vmem>>) attributes {dimension_semantics = [#tpu.dimension_semantics<arbitrary>], iteration_bounds = array<i64: 1>, scalar_prefetch = 1 : i64, scratch_operands = 0 : i64, tpu.core_type = #tpu.core_type<tc>, window_params = [{pipeline_mode = #tpu.pipeline_mode<synchronous>, transform_indices = @transform_0, window_bounds = array<i64: 128, 128>}, {pipeline_mode = #tpu.pipeline_mode<synchronous>, transform_indices = @transform_1, window_bounds = array<i64: 128, 128>}, {pipeline_mode = #tpu.pipeline_mode<synchronous>, transform_indices = @transform_2, window_bounds = array<i64: 128, 1>}, {pipeline_mode = #tpu.pipeline_mode<synchronous>, transform_indices = @transform_3, window_bounds = array<i64: 128, 128>}]} {
    %c0 = arith.constant 0 : index
    %0 = memref.load %arg1[%c0] : memref<1xi32, #tpu.memory_space<smem>>
    %c0_0 = arith.constant 0 : index
    %c0_1 = arith.constant 0 : index
    %1 = vector.load %arg2[%c0_0, %c0_1] : memref<128x128xf32, #tpu.memory_space<vmem>>, vector<128x128xf32>
    %c0_2 = arith.constant 0 : index
    %c0_3 = arith.constant 0 : index
    %2 = vector.load %arg3[%c0_2, %c0_3] : memref<128x128xf32, #tpu.memory_space<vmem>>, vector<128x128xf32>
    %c0_4 = arith.constant 0 : index
    %c0_5 = arith.constant 0 : index
    %3 = vector.load %arg4[%c0_4, %c0_5] : memref<128x1xf32, #tpu.memory_space<vmem>>, vector<128x1xf32>
    %4 = arith.negf %3 : vector<128x1xf32>
    %5 = math.exp %4 : vector<128x1xf32>
    %cst = arith.constant 1.000000e+00 : f32
    %6 = vector.broadcast %cst : f32 to vector<128x1xf32>
    %7 = arith.addf %6, %5 : vector<128x1xf32>
    %8 = arith.divf %6, %7 : vector<128x1xf32>
    %9 = arith.mulf %1, %1 : vector<128x128xf32>
    %cst_6 = arith.constant dense<0.000000e+00> : vector<128xf32>
    %10 = vector.multi_reduction <add>, %9, %cst_6 [1] : vector<128x128xf32> to vector<128xf32>
    %11 = vector.shape_cast %10 : vector<128xf32> to vector<128x1xf32>
    %cst_7 = arith.constant 9.99999996E-13 : f32
    %12 = vector.broadcast %cst_7 : f32 to vector<128x1xf32>
    %13 = arith.maximumf %11, %12 : vector<128x1xf32>
    %14 = math.rsqrt %13 : vector<128x1xf32>
    %15 = vector.broadcast %14 : vector<128x1xf32> to vector<128x128xf32>
    %16 = arith.mulf %1, %15 : vector<128x128xf32>
    %17 = arith.subf %2, %16 : vector<128x128xf32>
    %18 = vector.broadcast %8 : vector<128x1xf32> to vector<128x128xf32>
    %19 = arith.mulf %18, %17 : vector<128x128xf32>
    %20 = arith.addf %16, %19 : vector<128x128xf32>
    %21 = arith.mulf %20, %20 : vector<128x128xf32>
    %cst_8 = arith.constant dense<0.000000e+00> : vector<128xf32>
    %22 = vector.multi_reduction <add>, %21, %cst_8 [1] : vector<128x128xf32> to vector<128xf32>
    %23 = vector.shape_cast %22 : vector<128xf32> to vector<128x1xf32>
    %cst_9 = arith.constant 9.99999996E-13 : f32
    %24 = vector.broadcast %cst_9 : f32 to vector<128x1xf32>
    %25 = arith.maximumf %23, %24 : vector<128x1xf32>
    %26 = math.rsqrt %25 : vector<128x1xf32>
    %27 = vector.broadcast %26 : vector<128x1xf32> to vector<128x128xf32>
    %28 = arith.mulf %20, %27 : vector<128x128xf32>
    %29 = tpu.iota {dimensions = array<i32: 0>} : vector<128x1xi32>
    %30 = vector.broadcast %0 : i32 to vector<128x1xi32>
    %31 = arith.cmpi slt, %29, %30 : vector<128x1xi32>
    %cst_10 = arith.constant 0.000000e+00 : f32
    %32 = vector.shape_cast %31 : vector<128x1xi1> to vector<128x1xi1>
    %33 = vector.broadcast %32 : vector<128x1xi1> to vector<128x128xi1>
    %34 = vector.broadcast %cst_10 : f32 to vector<128x128xf32>
    %35 = arith.select %33, %28, %34 : vector<128x128xi1>, vector<128x128xf32>
    %36 = arith.truncf %35 : vector<128x128xf32> to vector<128x128xbf16>
    %c0_11 = arith.constant 0 : index
    %c0_12 = arith.constant 0 : index
    %37 = vector.load %arg5[%c0_11, %c0_12] : memref<128x128xbf16, #tpu.memory_space<vmem>>, vector<128x128xbf16>
    tpu.vector_store %arg5[%c0_11, %c0_12], %36 {strides = array<i32>} : memref<128x128xbf16, #tpu.memory_space<vmem>>, vector<128x128xbf16>,
    return
  }
  func.func @transform_0(%arg0: i32, %arg1: memref<1xi32, #tpu.memory_space<smem>>) -> (i32, i32) {
    %c0_i32 = arith.constant 0 : i32
    %c0_i32_0 = arith.constant 0 : i32
    %c0_i32_1 = arith.constant 0 : i32
    return %c0_i32, %c0_i32_0 : i32, i32
  }
  func.func @transform_1(%arg0: i32, %arg1: memref<1xi32, #tpu.memory_space<smem>>) -> (i32, i32) {
    %c0_i32 = arith.constant 0 : i32
    %c0_i32_0 = arith.constant 0 : i32
    %c0_i32_1 = arith.constant 0 : i32
    return %c0_i32, %c0_i32_0 : i32, i32
  }
  func.func @transform_2(%arg0: i32, %arg1: memref<1xi32, #tpu.memory_space<smem>>) -> (i32, i32) {
    %c0_i32 = arith.constant 0 : i32
    %c0_i32_0 = arith.constant 0 : i32
    %c0_i32_1 = arith.constant 0 : i32
    return %c0_i32, %c0_i32_0 : i32, i32
  }
  func.func @transform_3(%arg0: i32, %arg1: memref<1xi32, #tpu.memory_space<smem>>) -> (i32, i32) {
    %c0_i32 = arith.constant 0 : i32
    %c0_i32_0 = arith.constant 0 : i32
    %c0_i32_1 = arith.constant 0 : i32
    return %c0_i32, %c0_i32_0 : i32, i32
  }
}

</mosaic_0001>

<llo_original>
// kernel: tpu_custom_call.1
$region0: #{tpu_custom_call.1}
  #allocation0 [shape = 'u32[]', space=smem, size = 0x4, offset = 0x4, fixed_abs, tag = 'smem constant byte address 0x4 - core index']
  #allocation1 [shape = 'u32[72,128]{1,0:T(1,128)}', space=vmem, size = 0x9000, scoped, tag = 'internal scratch']
  #allocation2 [shape = 's32[1]{0}', space=sflag, size = 0x4, scoped, tag = 'scoped memory for tpu_custom_call.1']
  #allocation3 [shape = 's32[1]{0:T(128)S(6)}', space=smem, size = 0x200, scoped, tag = 'prefetched SMEM operand 0']
  %s0 = inlined_call_operand.<no memory space> [shape: s32[1], index: 0, kind: input, shape index: {}]
  %s1 = inlined_call_operand.vmem [shape: f32[128,128], index: 1, kind: input, shape index: {}]
  %s2 = inlined_call_operand.hbm [shape: f32[128,128], index: 2, kind: input, shape index: {}]
  %s3 = inlined_call_operand.vmem [shape: f32[128,1], index: 3, kind: input, shape index: {}]
  %s4 = inlined_call_operand.hbm [shape: bf16[128,128], index: 4, kind: output, shape index: {}]
  %s5 = sld [smem:[#allocation0]]
  $region26: #{tpu_custom_call.1} parent=0
    _
  %s7 = ssub.s32 1, %s5
  %s8 = scalar_select 0, %s7, %s5
  %9 = sst [smem:[#allocation3]] %s0
  $region1: #{tpu_custom_call.1} parent=0
    #allocation4 [shape = 'u8[65536]{0}', space=vmem, size = 0x10000, scoped, tag = 'input window, operand 2, single buffered']
    #allocation5 [shape = 's32[1]{0}', space=sflag, size = 0x4, scoped, tag = 'scoped memory for tpu_custom_call.1']
    #allocation6 [shape = 's32[1]{0}', space=sflag, size = 0x4, scoped, tag = 'scoped memory for tpu_custom_call.1']
    #allocation7 [shape = 'u8[32768]{0}', space=vmem, size = 0x8000, scoped, tag = 'output window, operand 0, single buffered']
    %10 = vsyncpa [#allocation5], 0
    %11 = vsyncpa [#allocation6], 0
    // Predicated region
    $region2: #{tpu_custom_call.1} parent=1 // pred_check
      _
    $region3: #{tpu_custom_call.1} parent=1 // pred_check_branch
      %13 = sbr.rel (0) target = $region5
    $region4: #{tpu_custom_call.1} parent=1 // pred_region
      _
    $region5: #{tpu_custom_call.1} parent=1 // pred_fallthru
      _
    // Predicated region
    $region6: #{tpu_custom_call.1} parent=1 // pred_check
      _
    $region7: #{tpu_custom_call.1} parent=1 // pred_check_branch
      %15 = sbr.rel (0) target = $region9
    $region8: #{tpu_custom_call.1} parent=1 // pred_region
      %17 = vsyncadd [#allocation5], 0
      %s18 = sshll.u32 %s2, 4
      %s19 = int_to_ptr.hbm [resolvable:$true] %s18
      %s20 = sshll.u32 [#allocation4], 4
      %s21 = int_to_ptr.vmem [resolvable:$true] %s20
      %26 = dma.hbm_to_vmem [thread:$0]  %s19, 2048, %s21, [#allocation5], 128, 128, 8
    $region9: #{tpu_custom_call.1} parent=1 // pred_fallthru
      _
    // Predicated region
    $region10: #{tpu_custom_call.1} parent=1 // pred_check
      _
    $region11: #{tpu_custom_call.1} parent=1 // pred_check_branch
      %28 = sbr.rel (0) target = $region13
    $region12: #{tpu_custom_call.1} parent=1 // pred_region
      _
    $region13: #{tpu_custom_call.1} parent=1 // pred_fallthru
      _
    // Predicated region
    $region14: #{tpu_custom_call.1} parent=1 // pred_check
      _
    $region15: #{tpu_custom_call.1} parent=1 // pred_check_branch
      %30 = sbr.rel (0) target = $region17
    $region16: #{tpu_custom_call.1} parent=1 // pred_region
      %32 = dma.done [#allocation5], 2048
    $region17: #{tpu_custom_call.1} parent=1 // pred_fallthru
      _
    %s33 = sld [smem:[#allocation3]]
    %v34 = vld [vmem:[%s1] sm:$0xff]
    %v35 = vld [vmem:[%s1 + $0x8] sm:$0xff]
    %v36 = vld [vmem:[%s1 + $0x10] sm:$0xff]
    %v37 = vld [vmem:[%s1 + $0x18] sm:$0xff]
    %v38 = vld [vmem:[%s1 + $0x20] sm:$0xff]
    %v39 = vld [vmem:[%s1 + $0x28] sm:$0xff]
    %v40 = vld [vmem:[%s1 + $0x30] sm:$0xff]
    %v41 = vld [vmem:[%s1 + $0x38] sm:$0xff]
    %v42 = vld [vmem:[%s1 + $0x40] sm:$0xff]
    %v43 = vld [vmem:[%s1 + $0x48] sm:$0xff]
    %v44 = vld [vmem:[%s1 + $0x50] sm:$0xff]
    %v45 = vld [vmem:[%s1 + $0x58] sm:$0xff]
    %v46 = vld [vmem:[%s1 + $0x60] sm:$0xff]
    %v47 = vld [vmem:[%s1 + $0x68] sm:$0xff]
    %v48 = vld [vmem:[%s1 + $0x70] sm:$0xff]
    %v49 = vld [vmem:[%s1 + $0x78] sm:$0xff]
    %v50 = vld [vmem:[#allocation4] sm:$0xff]
    %v51 = vld [vmem:[#allocation4 + $0x8] sm:$0xff]
    %v52 = vld [vmem:[#allocation4 + $0x10] sm:$0xff]
    %v53 = vld [vmem:[#allocation4 + $0x18] sm:$0xff]
    %v54 = vld [vmem:[#allocation4 + $0x20] sm:$0xff]
    %v55 = vld [vmem:[#allocation4 + $0x28] sm:$0xff]
    %v56 = vld [vmem:[#allocation4 + $0x30] sm:$0xff]
    %v57 = vld [vmem:[#allocation4 + $0x38] sm:$0xff]
    %v58 = vld [vmem:[#allocation4 + $0x40] sm:$0xff]
    %v59 = vld [vmem:[#allocation4 + $0x48] sm:$0xff]
    %v60 = vld [vmem:[#allocation4 + $0x50] sm:$0xff]
    %v61 = vld [vmem:[#allocation4 + $0x58] sm:$0xff]
    %v62 = vld [vmem:[#allocation4 + $0x60] sm:$0xff]
    %v63 = vld [vmem:[#allocation4 + $0x68] sm:$0xff]
    %v64 = vld [vmem:[#allocation4 + $0x70] sm:$0xff]
    %v65 = vld [vmem:[#allocation4 + $0x78] sm:$0xff]
    %v66 = vld [vmem:[%s3] sm:$0xff]
    %v67 = vld [vmem:[%s3 + $0x8] sm:$0xff]
    %v68 = vld [vmem:[%s3 + $0x10] sm:$0xff]
    %v69 = vld [vmem:[%s3 + $0x18] sm:$0xff]
    %v70 = vld [vmem:[%s3 + $0x20] sm:$0xff]
    %v71 = vld [vmem:[%s3 + $0x28] sm:$0xff]
    %v72 = vld [vmem:[%s3 + $0x30] sm:$0xff]
    %v73 = vld [vmem:[%s3 + $0x38] sm:$0xff]
    %v74 = vld [vmem:[%s3 + $0x40] sm:$0xff]
    %v75 = vld [vmem:[%s3 + $0x48] sm:$0xff]
    %v76 = vld [vmem:[%s3 + $0x50] sm:$0xff]
    %v77 = vld [vmem:[%s3 + $0x58] sm:$0xff]
    %v78 = vld [vmem:[%s3 + $0x60] sm:$0xff]
    %v79 = vld [vmem:[%s3 + $0x68] sm:$0xff]
    %v80 = vld [vmem:[%s3 + $0x70] sm:$0xff]
    %v81 = vld [vmem:[%s3 + $0x78] sm:$0xff]
    %v82 = vxor.u32 %v66, 2147483648
    %v83 = vxor.u32 %v67, 2147483648
    %v84 = vxor.u32 %v68, 2147483648
    %v85 = vxor.u32 %v69, 2147483648
    %v86 = vxor.u32 %v70, 2147483648
    %v87 = vxor.u32 %v71, 2147483648
    %v88 = vxor.u32 %v72, 2147483648
    %v89 = vxor.u32 %v73, 2147483648
    %v90 = vxor.u32 %v74, 2147483648
    %v91 = vxor.u32 %v75, 2147483648
    %v92 = vxor.u32 %v76, 2147483648
    %v93 = vxor.u32 %v77, 2147483648
    %v94 = vxor.u32 %v78, 2147483648
    %v95 = vxor.u32 %v79, 2147483648
    %v96 = vxor.u32 %v80, 2147483648
    %v97 = vxor.u32 %v81, 2147483648
    %v98 = vmul.f32 %v82, 1.442695
    %v99 = vpow.pop %v98
    %v100 = vmul.f32 %v83, 1.442695
    %v101 = vpow.pop %v100
    %v102 = vmul.f32 %v84, 1.442695
    %v103 = vpow.pop %v102
    %v104 = vmul.f32 %v85, 1.442695
    %v105 = vpow.pop %v104
    %v106 = vmul.f32 %v86, 1.442695
    %v107 = vpow.pop %v106
    %v108 = vmul.f32 %v87, 1.442695
    %v109 = vpow.pop %v108
    %v110 = vmul.f32 %v88, 1.442695
    %v111 = vpow.pop %v110
    %v112 = vmul.f32 %v89, 1.442695
    %v113 = vpow.pop %v112
    %v114 = vmul.f32 %v90, 1.442695
    %v115 = vpow.pop %v114
    %v116 = vmul.f32 %v91, 1.442695
    %v117 = vpow.pop %v116
    %v118 = vmul.f32 %v92, 1.442695
    %v119 = vpow.pop %v118
    %v120 = vmul.f32 %v93, 1.442695
    %v121 = vpow.pop %v120
    %v122 = vmul.f32 %v94, 1.442695
    %v123 = vpow.pop %v122
    %v124 = vmul.f32 %v95, 1.442695
    %v125 = vpow.pop %v124
    %v126 = vmul.f32 %v96, 1.442695
    %v127 = vpow.pop %v126
    %v128 = vmul.f32 %v97, 1.442695
    %v129 = vpow.pop %v128
    %v130 = vadd.f32 %v99, 1.0
    %v131 = vadd.f32 %v101, 1.0
    %v132 = vadd.f32 %v103, 1.0
    %v133 = vadd.f32 %v105, 1.0
    %v134 = vadd.f32 %v107, 1.0
    %v135 = vadd.f32 %v109, 1.0
    %v136 = vadd.f32 %v111, 1.0
    %v137 = vadd.f32 %v113, 1.0
    %v138 = vadd.f32 %v115, 1.0
    %v139 = vadd.f32 %v117, 1.0
    %v140 = vadd.f32 %v119, 1.0
    %v141 = vadd.f32 %v121, 1.0
    %v142 = vadd.f32 %v123, 1.0
    %v143 = vadd.f32 %v125, 1.0
    %v144 = vadd.f32 %v127, 1.0
    %v145 = vadd.f32 %v129, 1.0
    %v146 = vrcp.pop %v130
    %v147 = vmul.f32 %v130, %v146
    %v148 = vsub.f32 1.0, %v147
    %v149 = vmul.f32 %v146, %v148
    %v150 = vadd.f32 %v146, %v149
    %vm151 = vweird.f32 %v130
    %vm152 = vweird.f32 %v146
    %vm153 = vmor %vm151, %vm152
    %v154 = vsel %vm153, %v146, %v150
    %v155 = vand.u32 2147483647, %v130
    %vm156 = vcmp.eq.f32.partialorder %v155, 8.507059e+37
    %v157 = vand.u32 %v130, 2147483648
    %v158 = vor.u32 1.1754944e-38, %v157
    %v159 = vsel %vm156, %v158, %v154
    %v160 = vmul.f32 1.0, %v159
    %v161 = vrcp.pop %v131
    %v162 = vmul.f32 %v131, %v161
    %v163 = vsub.f32 1.0, %v162
    %v164 = vmul.f32 %v161, %v163
    %v165 = vadd.f32 %v161, %v164
    %vm166 = vweird.f32 %v131
    %vm167 = vweird.f32 %v161
    %vm168 = vmor %vm166, %vm167
    %v169 = vsel %vm168, %v161, %v165
    %v170 = vand.u32 2147483647, %v131
    %vm171 = vcmp.eq.f32.partialorder %v170, 8.507059e+37
    %v172 = vand.u32 %v131, 2147483648
    %v173 = vor.u32 1.1754944e-38, %v172
    %v174 = vsel %vm171, %v173, %v169
    %v175 = vmul.f32 1.0, %v174
    %v176 = vrcp.pop %v132
    %v177 = vmul.f32 %v132, %v176
    %v178 = vsub.f32 1.0, %v177
    %v179 = vmul.f32 %v176, %v178
    %v180 = vadd.f32 %v176, %v179
    %vm181 = vweird.f32 %v132
    %vm182 = vweird.f32 %v176
    %vm183 = vmor %vm181, %vm182
    %v184 = vsel %vm183, %v176, %v180
    %v185 = vand.u32 2147483647, %v132
    %vm186 = vcmp.eq.f32.partialorder %v185, 8.507059e+37
    %v187 = vand.u32 %v132, 2147483648
    %v188 = vor.u32 1.1754944e-38, %v187
    %v189 = vsel %vm186, %v188, %v184
    %v190 = vmul.f32 1.0, %v189
    %v191 = vrcp.pop %v133
    %v192 = vmul.f32 %v133, %v191
    %v193 = vsub.f32 1.0, %v192
    %v194 = vmul.f32 %v191, %v193
    %v195 = vadd.f32 %v191, %v194
    %vm196 = vweird.f32 %v133
    %vm197 = vweird.f32 %v191
    %vm198 = vmor %vm196, %vm197
    %v199 = vsel %vm198, %v191, %v195
    %v200 = vand.u32 2147483647, %v133
    %vm201 = vcmp.eq.f32.partialorder %v200, 8.507059e+37
    %v202 = vand.u32 %v133, 2147483648
    %v203 = vor.u32 1.1754944e-38, %v202
    %v204 = vsel %vm201, %v203, %v199
    %v205 = vmul.f32 1.0, %v204
    %v206 = vrcp.pop %v134
    %v207 = vmul.f32 %v134, %v206
    %v208 = vsub.f32 1.0, %v207
    %v209 = vmul.f32 %v206, %v208
    %v210 = vadd.f32 %v206, %v209
    %vm211 = vweird.f32 %v134
    %vm212 = vweird.f32 %v206
    %vm213 = vmor %vm211, %vm212
    %v214 = vsel %vm213, %v206, %v210
    %v215 = vand.u32 2147483647, %v134
    %vm216 = vcmp.eq.f32.partialorder %v215, 8.507059e+37
    %v217 = vand.u32 %v134, 2147483648
    %v218 = vor.u32 1.1754944e-38, %v217
    %v219 = vsel %vm216, %v218, %v214
    %v220 = vmul.f32 1.0, %v219
    %v221 = vrcp.pop %v135
    %v222 = vmul.f32 %v135, %v221
    %v223 = vsub.f32 1.0, %v222
    %v224 = vmul.f32 %v221, %v223
    %v225 = vadd.f32 %v221, %v224
    %vm226 = vweird.f32 %v135
    %vm227 = vweird.f32 %v221
    %vm228 = vmor %vm226, %vm227
    %v229 = vsel %vm228, %v221, %v225
    %v230 = vand.u32 2147483647, %v135
    %vm231 = vcmp.eq.f32.partialorder %v230, 8.507059e+37
    %v232 = vand.u32 %v135, 2147483648
    %v233 = vor.u32 1.1754944e-38, %v232
    %v234 = vsel %vm231, %v233, %v229
    %v235 = vmul.f32 1.0, %v234
    %v236 = vrcp.pop %v136
    %v237 = vmul.f32 %v136, %v236
    %v238 = vsub.f32 1.0, %v237
    %v239 = vmul.f32 %v236, %v238
    %v240 = vadd.f32 %v236, %v239
    %vm241 = vweird.f32 %v136
    %vm242 = vweird.f32 %v236
    %vm243 = vmor %vm241, %vm242
    %v244 = vsel %vm243, %v236, %v240
    %v245 = vand.u32 2147483647, %v136
    %vm246 = vcmp.eq.f32.partialorder %v245, 8.507059e+37
    %v247 = vand.u32 %v136, 2147483648
    %v248 = vor.u32 1.1754944e-38, %v247
    %v249 = vsel %vm246, %v248, %v244
    %v250 = vmul.f32 1.0, %v249
    %v251 = vrcp.pop %v137
    %v252 = vmul.f32 %v137, %v251
    %v253 = vsub.f32 1.0, %v252
    %v254 = vmul.f32 %v251, %v253
    %v255 = vadd.f32 %v251, %v254
    %vm256 = vweird.f32 %v137
    %vm257 = vweird.f32 %v251
    %vm258 = vmor %vm256, %vm257
    %v259 = vsel %vm258, %v251, %v255
    %v260 = vand.u32 2147483647, %v137
    %vm261 = vcmp.eq.f32.partialorder %v260, 8.507059e+37
    %v262 = vand.u32 %v137, 2147483648
    %v263 = vor.u32 1.1754944e-38, %v262
    %v264 = vsel %vm261, %v263, %v259
    %v265 = vmul.f32 1.0, %v264
    %v266 = vrcp.pop %v138
    %v267 = vmul.f32 %v138, %v266
    %v268 = vsub.f32 1.0, %v267
    %v269 = vmul.f32 %v266, %v268
    %v270 = vadd.f32 %v266, %v269
    %vm271 = vweird.f32 %v138
    %vm272 = vweird.f32 %v266
    %vm273 = vmor %vm271, %vm272
    %v274 = vsel %vm273, %v266, %v270
    %v275 = vand.u32 2147483647, %v138
    %vm276 = vcmp.eq.f32.partialorder %v275, 8.507059e+37
    %v277 = vand.u32 %v138, 2147483648
    %v278 = vor.u32 1.1754944e-38, %v277
    %v279 = vsel %vm276, %v278, %v274
    %v280 = vmul.f32 1.0, %v279
    %v281 = vrcp.pop %v139
    %v282 = vmul.f32 %v139, %v281
    %v283 = vsub.f32 1.0, %v282
    %v284 = vmul.f32 %v281, %v283
    %v285 = vadd.f32 %v281, %v284
    %vm286 = vweird.f32 %v139
    %vm287 = vweird.f32 %v281
    %vm288 = vmor %vm286, %vm287
    %v289 = vsel %vm288, %v281, %v285
    %v290 = vand.u32 2147483647, %v139
    %vm291 = vcmp.eq.f32.partialorder %v290, 8.507059e+37
    %v292 = vand.u32 %v139, 2147483648
    %v293 = vor.u32 1.1754944e-38, %v292
    %v294 = vsel %vm291, %v293, %v289
    %v295 = vmul.f32 1.0, %v294
    %v296 = vrcp.pop %v140
    %v297 = vmul.f32 %v140, %v296
    %v298 = vsub.f32 1.0, %v297
    %v299 = vmul.f32 %v296, %v298
    %v300 = vadd.f32 %v296, %v299
    %vm301 = vweird.f32 %v140
    %vm302 = vweird.f32 %v296
    %vm303 = vmor %vm301, %vm302
    %v304 = vsel %vm303, %v296, %v300
    %v305 = vand.u32 2147483647, %v140
    %vm306 = vcmp.eq.f32.partialorder %v305, 8.507059e+37
    %v307 = vand.u32 %v140, 2147483648
    %v308 = vor.u32 1.1754944e-38, %v307
    %v309 = vsel %vm306, %v308, %v304
    %v310 = vmul.f32 1.0, %v309
    %v311 = vrcp.pop %v141
    %v312 = vmul.f32 %v141, %v311
    %v313 = vsub.f32 1.0, %v312
    %v314 = vmul.f32 %v311, %v313
    %v315 = vadd.f32 %v311, %v314
    %vm316 = vweird.f32 %v141
    %vm317 = vweird.f32 %v311
    %vm318 = vmor %vm316, %vm317
    %v319 = vsel %vm318, %v311, %v315
    %v320 = vand.u32 2147483647, %v141
    %vm321 = vcmp.eq.f32.partialorder %v320, 8.507059e+37
    %v322 = vand.u32 %v141, 2147483648
    %v323 = vor.u32 1.1754944e-38, %v322
    %v324 = vsel %vm321, %v323, %v319
    %v325 = vmul.f32 1.0, %v324
    %v326 = vrcp.pop %v142
    %v327 = vmul.f32 %v142, %v326
    %v328 = vsub.f32 1.0, %v327
    %v329 = vmul.f32 %v326, %v328
    %v330 = vadd.f32 %v326, %v329
    %vm331 = vweird.f32 %v142
    %vm332 = vweird.f32 %v326
    %vm333 = vmor %vm331, %vm332
    %v334 = vsel %vm333, %v326, %v330
    %v335 = vand.u32 2147483647, %v142
    %vm336 = vcmp.eq.f32.partialorder %v335, 8.507059e+37
    %v337 = vand.u32 %v142, 2147483648
    %v338 = vor.u32 1.1754944e-38, %v337
    %v339 = vsel %vm336, %v338, %v334
    %v340 = vmul.f32 1.0, %v339
    %v341 = vrcp.pop %v143
    %v342 = vmul.f32 %v143, %v341
    %v343 = vsub.f32 1.0, %v342
    %v344 = vmul.f32 %v341, %v343
    %v345 = vadd.f32 %v341, %v344
    %vm346 = vweird.f32 %v143
    %vm347 = vweird.f32 %v341
    %vm348 = vmor %vm346, %vm347
    %v349 = vsel %vm348, %v341, %v345
    %v350 = vand.u32 2147483647, %v143
    %vm351 = vcmp.eq.f32.partialorder %v350, 8.507059e+37
    %v352 = vand.u32 %v143, 2147483648
    %v353 = vor.u32 1.1754944e-38, %v352
    %v354 = vsel %vm351, %v353, %v349
    %v355 = vmul.f32 1.0, %v354
    %v356 = vrcp.pop %v144
    %v357 = vmul.f32 %v144, %v356
    %v358 = vsub.f32 1.0, %v357
    %v359 = vmul.f32 %v356, %v358
    %v360 = vadd.f32 %v356, %v359
    %vm361 = vweird.f32 %v144
    %vm362 = vweird.f32 %v356
    %vm363 = vmor %vm361, %vm362
    %v364 = vsel %vm363, %v356, %v360
    %v365 = vand.u32 2147483647, %v144
    %vm366 = vcmp.eq.f32.partialorder %v365, 8.507059e+37
    %v367 = vand.u32 %v144, 2147483648
    %v368 = vor.u32 1.1754944e-38, %v367
    %v369 = vsel %vm366, %v368, %v364
    %v370 = vmul.f32 1.0, %v369
    %v371 = vrcp.pop %v145
    %v372 = vmul.f32 %v145, %v371
    %v373 = vsub.f32 1.0, %v372
    %v374 = vmul.f32 %v371, %v373
    %v375 = vadd.f32 %v371, %v374
    %vm376 = vweird.f32 %v145
    %vm377 = vweird.f32 %v371
    %vm378 = vmor %vm376, %vm377
    %v379 = vsel %vm378, %v371, %v375
    %v380 = vand.u32 2147483647, %v145
    %vm381 = vcmp.eq.f32.partialorder %v380, 8.507059e+37
    %v382 = vand.u32 %v145, 2147483648
    %v383 = vor.u32 1.1754944e-38, %v382
    %v384 = vsel %vm381, %v383, %v379
    %v385 = vmul.f32 1.0, %v384
    %v386 = vmul.f32 %v34, %v34
    %v387 = vmul.f32 %v35, %v35
    %v388 = vmul.f32 %v36, %v36
    %v389 = vmul.f32 %v37, %v37
    %v390 = vmul.f32 %v38, %v38
    %v391 = vmul.f32 %v39, %v39
    %v392 = vmul.f32 %v40, %v40
    %v393 = vmul.f32 %v41, %v41
    %v394 = vmul.f32 %v42, %v42
    %v395 = vmul.f32 %v43, %v43
    %v396 = vmul.f32 %v44, %v44
    %v397 = vmul.f32 %v45, %v45
    %v398 = vmul.f32 %v46, %v46
    %v399 = vmul.f32 %v47, %v47
    %v400 = vmul.f32 %v48, %v48
    %v401 = vmul.f32 %v49, %v49
    %402 = vadd.xlane.f32.xlu0 %v386
    %v403 = vpop.xlane.xlu0 %402
    %404 = vadd.xlane.f32.xlu0 %v387
    %v405 = vpop.xlane.xlu0 %404
    %406 = vadd.xlane.f32.xlu0 %v388
    %v407 = vpop.xlane.xlu0 %406
    %408 = vadd.xlane.f32.xlu0 %v389
    %v409 = vpop.xlane.xlu0 %408
    %410 = vadd.xlane.f32.xlu0 %v390
    %v411 = vpop.xlane.xlu0 %410
    %412 = vadd.xlane.f32.xlu0 %v391
    %v413 = vpop.xlane.xlu0 %412
    %414 = vadd.xlane.f32.xlu0 %v392
    %v415 = vpop.xlane.xlu0 %414
    %416 = vadd.xlane.f32.xlu0 %v393
    %v417 = vpop.xlane.xlu0 %416
    %418 = vadd.xlane.f32.xlu0 %v394
    %v419 = vpop.xlane.xlu0 %418
    %420 = vadd.xlane.f32.xlu0 %v395
    %v421 = vpop.xlane.xlu0 %420
    %422 = vadd.xlane.f32.xlu0 %v396
    %v423 = vpop.xlane.xlu0 %422
    %424 = vadd.xlane.f32.xlu0 %v397
    %v425 = vpop.xlane.xlu0 %424
    %426 = vadd.xlane.f32.xlu0 %v398
    %v427 = vpop.xlane.xlu0 %426
    %428 = vadd.xlane.f32.xlu0 %v399
    %v429 = vpop.xlane.xlu0 %428
    %430 = vadd.xlane.f32.xlu0 %v400
    %v431 = vpop.xlane.xlu0 %430
    %432 = vadd.xlane.f32.xlu0 %v401
    %v433 = vpop.xlane.xlu0 %432
    %v434 = vmax.f32 %v403, 1e-12
    %v435 = vmax.f32 %v405, 1e-12
    %v436 = vmax.f32 %v407, 1e-12
    %v437 = vmax.f32 %v409, 1e-12
    %v438 = vmax.f32 %v411, 1e-12
    %v439 = vmax.f32 %v413, 1e-12
    %v440 = vmax.f32 %v415, 1e-12
    %v441 = vmax.f32 %v417, 1e-12
    %v442 = vmax.f32 %v419, 1e-12
    %v443 = vmax.f32 %v421, 1e-12
    %v444 = vmax.f32 %v423, 1e-12
    %v445 = vmax.f32 %v425, 1e-12
    %v446 = vmax.f32 %v427, 1e-12
    %v447 = vmax.f32 %v429, 1e-12
    %v448 = vmax.f32 %v431, 1e-12
    %v449 = vmax.f32 %v433, 1e-12
    %v450 = vrsqrt.pop %v434
    %v451 = vmul.f32 %v450, %v434
    %v452 = vmul.f32 %v451, %v450
    %v453 = vmul.f32 0.5, %v452
    %v454 = vsub.f32 1.5, %v453
    %v455 = vmul.f32 %v450, %v454
    %vm456 = vweird.f32 %v434
    %vm457 = vweird.f32 %v450
    %vm458 = vmor %vm456, %vm457
    %v459 = vsel %vm458, %v450, %v455
    %v460 = vrsqrt.pop %v435
    %v461 = vmul.f32 %v460, %v435
    %v462 = vmul.f32 %v461, %v460
    %v463 = vmul.f32 0.5, %v462
    %v464 = vsub.f32 1.5, %v463
    %v465 = vmul.f32 %v460, %v464
    %vm466 = vweird.f32 %v435
    %vm467 = vweird.f32 %v460
    %vm468 = vmor %vm466, %vm467
    %v469 = vsel %vm468, %v460, %v465
    %v470 = vrsqrt.pop %v436
    %v471 = vmul.f32 %v470, %v436
    %v472 = vmul.f32 %v471, %v470
    %v473 = vmul.f32 0.5, %v472
    %v474 = vsub.f32 1.5, %v473
    %v475 = vmul.f32 %v470, %v474
    %vm476 = vweird.f32 %v436
    %vm477 = vweird.f32 %v470
    %vm478 = vmor %vm476, %vm477
    %v479 = vsel %vm478, %v470, %v475
    %v480 = vrsqrt.pop %v437
    %v481 = vmul.f32 %v480, %v437
    %v482 = vmul.f32 %v481, %v480
    %v483 = vmul.f32 0.5, %v482
    %v484 = vsub.f32 1.5, %v483
    %v485 = vmul.f32 %v480, %v484
    %vm486 = vweird.f32 %v437
    %vm487 = vweird.f32 %v480
    %vm488 = vmor %vm486, %vm487
    %v489 = vsel %vm488, %v480, %v485
    %v490 = vrsqrt.pop %v438
    %v491 = vmul.f32 %v490, %v438
    %v492 = vmul.f32 %v491, %v490
    %v493 = vmul.f32 0.5, %v492
    %v494 = vsub.f32 1.5, %v493
    %v495 = vmul.f32 %v490, %v494
    %vm496 = vweird.f32 %v438
    %vm497 = vweird.f32 %v490
    %vm498 = vmor %vm496, %vm497
    %v499 = vsel %vm498, %v490, %v495
    %v500 = vrsqrt.pop %v439
    %v501 = vmul.f32 %v500, %v439
    %v502 = vmul.f32 %v501, %v500
    %v503 = vmul.f32 0.5, %v502
    %v504 = vsub.f32 1.5, %v503
    %v505 = vmul.f32 %v500, %v504
    %vm506 = vweird.f32 %v439
    %vm507 = vweird.f32 %v500
    %vm508 = vmor %vm506, %vm507
    %v509 = vsel %vm508, %v500, %v505
    %v510 = vrsqrt.pop %v440
    %v511 = vmul.f32 %v510, %v440
    %v512 = vmul.f32 %v511, %v510
    %v513 = vmul.f32 0.5, %v512
    %v514 = vsub.f32 1.5, %v513
    %v515 = vmul.f32 %v510, %v514
    %vm516 = vweird.f32 %v440
    %vm517 = vweird.f32 %v510
    %vm518 = vmor %vm516, %vm517
    %v519 = vsel %vm518, %v510, %v515
    %v520 = vrsqrt.pop %v441
    %v521 = vmul.f32 %v520, %v441
    %v522 = vmul.f32 %v521, %v520
    %v523 = vmul.f32 0.5, %v522
    %v524 = vsub.f32 1.5, %v523
    %v525 = vmul.f32 %v520, %v524
    %vm526 = vweird.f32 %v441
    %vm527 = vweird.f32 %v520
    %vm528 = vmor %vm526, %vm527
    %v529 = vsel %vm528, %v520, %v525
    %v530 = vrsqrt.pop %v442
    %v531 = vmul.f32 %v530, %v442
    %v532 = vmul.f32 %v531, %v530
    %v533 = vmul.f32 0.5, %v532
    %v534 = vsub.f32 1.5, %v533
    %v535 = vmul.f32 %v530, %v534
    %vm536 = vweird.f32 %v442
    %vm537 = vweird.f32 %v530
    %vm538 = vmor %vm536, %vm537
    %v539 = vsel %vm538, %v530, %v535
    %v540 = vrsqrt.pop %v443
    %v541 = vmul.f32 %v540, %v443
    %v542 = vmul.f32 %v541, %v540
    %v543 = vmul.f32 0.5, %v542
    %v544 = vsub.f32 1.5, %v543
    %v545 = vmul.f32 %v540, %v544
    %vm546 = vweird.f32 %v443
    %vm547 = vweird.f32 %v540
    %vm548 = vmor %vm546, %vm547
    %v549 = vsel %vm548, %v540, %v545
    %v550 = vrsqrt.pop %v444
    %v551 = vmul.f32 %v550, %v444
    %v552 = vmul.f32 %v551, %v550
    %v553 = vmul.f32 0.5, %v552
    %v554 = vsub.f32 1.5, %v553
    %v555 = vmul.f32 %v550, %v554
    %vm556 = vweird.f32 %v444
    %vm557 = vweird.f32 %v550
    %vm558 = vmor %vm556, %vm557
    %v559 = vsel %vm558, %v550, %v555
    %v560 = vrsqrt.pop %v445
    %v561 = vmul.f32 %v560, %v445
    %v562 = vmul.f32 %v561, %v560
    %v563 = vmul.f32 0.5, %v562
    %v564 = vsub.f32 1.5, %v563
    %v565 = vmul.f32 %v560, %v564
    %vm566 = vweird.f32 %v445
    %vm567 = vweird.f32 %v560
    %vm568 = vmor %vm566, %vm567
    %v569 = vsel %vm568, %v560, %v565
    %v570 = vrsqrt.pop %v446
    %v571 = vmul.f32 %v570, %v446
    %v572 = vmul.f32 %v571, %v570
    %v573 = vmul.f32 0.5, %v572
    %v574 = vsub.f32 1.5, %v573
    %v575 = vmul.f32 %v570, %v574
    %vm576 = vweird.f32 %v446
    %vm577 = vweird.f32 %v570
    %vm578 = vmor %vm576, %vm577
    %v579 = vsel %vm578, %v570, %v575
    %v580 = vrsqrt.pop %v447
    %v581 = vmul.f32 %v580, %v447
    %v582 = vmul.f32 %v581, %v580
    %v583 = vmul.f32 0.5, %v582
    %v584 = vsub.f32 1.5, %v583
    %v585 = vmul.f32 %v580, %v584
    %vm586 = vweird.f32 %v447
    %vm587 = vweird.f32 %v580
    %vm588 = vmor %vm586, %vm587
    %v589 = vsel %vm588, %v580, %v585
    %v590 = vrsqrt.pop %v448
    %v591 = vmul.f32 %v590, %v448
    %v592 = vmul.f32 %v591, %v590
    %v593 = vmul.f32 0.5, %v592
    %v594 = vsub.f32 1.5, %v593
    %v595 = vmul.f32 %v590, %v594
    %vm596 = vweird.f32 %v448
    %vm597 = vweird.f32 %v590
    %vm598 = vmor %vm596, %vm597
    %v599 = vsel %vm598, %v590, %v595
    %v600 = vrsqrt.pop %v449
    %v601 = vmul.f32 %v600, %v449
    %v602 = vmul.f32 %v601, %v600
    %v603 = vmul.f32 0.5, %v602
    %v604 = vsub.f32 1.5, %v603
    %v605 = vmul.f32 %v600, %v604
    %vm606 = vweird.f32 %v449
    %vm607 = vweird.f32 %v600
    %vm608 = vmor %vm606, %vm607
    %v609 = vsel %vm608, %v600, %v605
    %v610 = vmul.f32 %v34, %v459
    %v611 = vmul.f32 %v35, %v469
    %v612 = vmul.f32 %v36, %v479
    %v613 = vmul.f32 %v37, %v489
    %v614 = vmul.f32 %v38, %v499
    %v615 = vmul.f32 %v39, %v509
    %v616 = vmul.f32 %v40, %v519
    %v617 = vmul.f32 %v41, %v529
    %v618 = vmul.f32 %v42, %v539
    %v619 = vmul.f32 %v43, %v549
    %v620 = vmul.f32 %v44, %v559
    %v621 = vmul.f32 %v45, %v569
    %v622 = vmul.f32 %v46, %v579
    %v623 = vmul.f32 %v47, %v589
    %v624 = vmul.f32 %v48, %v599
    %v625 = vmul.f32 %v49, %v609
    %v626 = vsub.f32 %v50, %v610
    %v627 = vsub.f32 %v51, %v611
    %v628 = vsub.f32 %v52, %v612
    %v629 = vsub.f32 %v53, %v613
    %v630 = vsub.f32 %v54, %v614
    %v631 = vsub.f32 %v55, %v615
    %v632 = vsub.f32 %v56, %v616
    %v633 = vsub.f32 %v57, %v617
    %v634 = vsub.f32 %v58, %v618
    %v635 = vsub.f32 %v59, %v619
    %v636 = vsub.f32 %v60, %v620
    %v637 = vsub.f32 %v61, %v621
    %v638 = vsub.f32 %v62, %v622
    %v639 = vsub.f32 %v63, %v623
    %v640 = vsub.f32 %v64, %v624
    %v641 = vsub.f32 %v65, %v625
    %643 = vset.pattern.permute.xlu0 0
    %644 = vperm.xlu0 %643, %v160
    %v645 = vpop.permute.xlu0 %644
    %648 = vset.pattern.permute.xlu0 0
    %649 = vperm.xlu0 %648, %v175
    %v650 = vpop.permute.xlu0 %649
    %653 = vset.pattern.permute.xlu0 0
    %654 = vperm.xlu0 %653, %v190
    %v655 = vpop.permute.xlu0 %654
    %658 = vset.pattern.permute.xlu0 0
    %659 = vperm.xlu0 %658, %v205
    %v660 = vpop.permute.xlu0 %659
    %663 = vset.pattern.permute.xlu0 0
    %664 = vperm.xlu0 %663, %v220
    %v665 = vpop.permute.xlu0 %664
    %668 = vset.pattern.permute.xlu0 0
    %669 = vperm.xlu0 %668, %v235
    %v670 = vpop.permute.xlu0 %669
    %673 = vset.pattern.permute.xlu0 0
    %674 = vperm.xlu0 %673, %v250
    %v675 = vpop.permute.xlu0 %674
    %678 = vset.pattern.permute.xlu0 0
    %679 = vperm.xlu0 %678, %v265
    %v680 = vpop.permute.xlu0 %679
    %683 = vset.pattern.permute.xlu0 0
    %684 = vperm.xlu0 %683, %v280
    %v685 = vpop.permute.xlu0 %684
    %688 = vset.pattern.permute.xlu0 0
    %689 = vperm.xlu0 %688, %v295
    %v690 = vpop.permute.xlu0 %689
    %693 = vset.pattern.permute.xlu0 0
    %694 = vperm.xlu0 %693, %v310
    %v695 = vpop.permute.xlu0 %694
    %698 = vset.pattern.permute.xlu0 0
    %699 = vperm.xlu0 %698, %v325
    %v700 = vpop.permute.xlu0 %699
    %703 = vset.pattern.permute.xlu0 0
    %704 = vperm.xlu0 %703, %v340
    %v705 = vpop.permute.xlu0 %704
    %708 = vset.pattern.permute.xlu0 0
    %709 = vperm.xlu0 %708, %v355
    %v710 = vpop.permute.xlu0 %709
    %713 = vset.pattern.permute.xlu0 0
    %714 = vperm.xlu0 %713, %v370
    %v715 = vpop.permute.xlu0 %714
    %718 = vset.pattern.permute.xlu0 0
    %719 = vperm.xlu0 %718, %v385
    %v720 = vpop.permute.xlu0 %719
    %v722 = vmul.f32 %v645, %v626
    %v723 = vmul.f32 %v650, %v627
    %v724 = vmul.f32 %v655, %v628
    %v725 = vmul.f32 %v660, %v629
    %v726 = vmul.f32 %v665, %v630
    %v727 = vmul.f32 %v670, %v631
    %v728 = vmul.f32 %v675, %v632
    %v729 = vmul.f32 %v680, %v633
    %v730 = vmul.f32 %v685, %v634
    %v731 = vmul.f32 %v690, %v635
    %v732 = vmul.f32 %v695, %v636
    %v733 = vmul.f32 %v700, %v637
    %v734 = vmul.f32 %v705, %v638
    %v735 = vmul.f32 %v710, %v639
    %v736 = vmul.f32 %v715, %v640
    %v737 = vmul.f32 %v720, %v641
    %v738 = vadd.f32 %v610, %v722
    %v739 = vadd.f32 %v611, %v723
    %v740 = vadd.f32 %v612, %v724
    %v741 = vadd.f32 %v613, %v725
    %v742 = vadd.f32 %v614, %v726
    %v743 = vadd.f32 %v615, %v727
    %v744 = vadd.f32 %v616, %v728
    %v745 = vadd.f32 %v617, %v729
    %v746 = vadd.f32 %v618, %v730
    %v747 = vadd.f32 %v619, %v731
    %v748 = vadd.f32 %v620, %v732
    %v749 = vadd.f32 %v621, %v733
    %v750 = vadd.f32 %v622, %v734
    %v751 = vadd.f32 %v623, %v735
    %v752 = vadd.f32 %v624, %v736
    %v753 = vadd.f32 %v625, %v737
    %v754 = vmul.f32 %v738, %v738
    %v755 = vmul.f32 %v739, %v739
    %v756 = vmul.f32 %v740, %v740
    %v757 = vmul.f32 %v741, %v741
    %v758 = vmul.f32 %v742, %v742
    %v759 = vmul.f32 %v743, %v743
    %v760 = vmul.f32 %v744, %v744
    %v761 = vmul.f32 %v745, %v745
    %v762 = vmul.f32 %v746, %v746
    %v763 = vmul.f32 %v747, %v747
    %v764 = vmul.f32 %v748, %v748
    %v765 = vmul.f32 %v749, %v749
    %v766 = vmul.f32 %v750, %v750
    %v767 = vmul.f32 %v751, %v751
    %v768 = vmul.f32 %v752, %v752
    %v769 = vmul.f32 %v753, %v753
    %770 = vadd.xlane.f32.xlu0 %v754
    %v771 = vpop.xlane.xlu0 %770
    %772 = vadd.xlane.f32.xlu0 %v755
    %v773 = vpop.xlane.xlu0 %772
    %774 = vadd.xlane.f32.xlu0 %v756
    %v775 = vpop.xlane.xlu0 %774
    %776 = vadd.xlane.f32.xlu0 %v757
    %v777 = vpop.xlane.xlu0 %776
    %778 = vadd.xlane.f32.xlu0 %v758
    %v779 = vpop.xlane.xlu0 %778
    %780 = vadd.xlane.f32.xlu0 %v759
    %v781 = vpop.xlane.xlu0 %780
    %782 = vadd.xlane.f32.xlu0 %v760
    %v783 = vpop.xlane.xlu0 %782
    %784 = vadd.xlane.f32.xlu0 %v761
    %v785 = vpop.xlane.xlu0 %784
    %786 = vadd.xlane.f32.xlu0 %v762
    %v787 = vpop.xlane.xlu0 %786
    %788 = vadd.xlane.f32.xlu0 %v763
    %v789 = vpop.xlane.xlu0 %788
    %790 = vadd.xlane.f32.xlu0 %v764
    %v791 = vpop.xlane.xlu0 %790
    %792 = vadd.xlane.f32.xlu0 %v765
    %v793 = vpop.xlane.xlu0 %792
    %794 = vadd.xlane.f32.xlu0 %v766
    %v795 = vpop.xlane.xlu0 %794
    %796 = vadd.xlane.f32.xlu0 %v767
    %v797 = vpop.xlane.xlu0 %796
    %798 = vadd.xlane.f32.xlu0 %v768
    %v799 = vpop.xlane.xlu0 %798
    %800 = vadd.xlane.f32.xlu0 %v769
    %v801 = vpop.xlane.xlu0 %800
    %v802 = vmax.f32 %v771, 1e-12
    %v803 = vmax.f32 %v773, 1e-12
    %v804 = vmax.f32 %v775, 1e-12
    %v805 = vmax.f32 %v777, 1e-12
    %v806 = vmax.f32 %v779, 1e-12
    %v807 = vmax.f32 %v781, 1e-12
    %v808 = vmax.f32 %v783, 1e-12
    %v809 = vmax.f32 %v785, 1e-12
    %v810 = vmax.f32 %v787, 1e-12
    %v811 = vmax.f32 %v789, 1e-12
    %v812 = vmax.f32 %v791, 1e-12
    %v813 = vmax.f32 %v793, 1e-12
    %v814 = vmax.f32 %v795, 1e-12
    %v815 = vmax.f32 %v797, 1e-12
    %v816 = vmax.f32 %v799, 1e-12
    %v817 = vmax.f32 %v801, 1e-12
    %v818 = vrsqrt.pop %v802
    %v819 = vmul.f32 %v818, %v802
    %v820 = vmul.f32 %v819, %v818
    %v821 = vmul.f32 0.5, %v820
    %v822 = vsub.f32 1.5, %v821
    %v823 = vmul.f32 %v818, %v822
    %vm824 = vweird.f32 %v802
    %vm825 = vweird.f32 %v818
    %vm826 = vmor %vm824, %vm825
    %v827 = vsel %vm826, %v818, %v823
    %v828 = vrsqrt.pop %v803
    %v829 = vmul.f32 %v828, %v803
    %v830 = vmul.f32 %v829, %v828
    %v831 = vmul.f32 0.5, %v830
    %v832 = vsub.f32 1.5, %v831
    %v833 = vmul.f32 %v828, %v832
    %vm834 = vweird.f32 %v803
    %vm835 = vweird.f32 %v828
    %vm836 = vmor %vm834, %vm835
    %v837 = vsel %vm836, %v828, %v833
    %v838 = vrsqrt.pop %v804
    %v839 = vmul.f32 %v838, %v804
    %v840 = vmul.f32 %v839, %v838
    %v841 = vmul.f32 0.5, %v840
    %v842 = vsub.f32 1.5, %v841
    %v843 = vmul.f32 %v838, %v842
    %vm844 = vweird.f32 %v804
    %vm845 = vweird.f32 %v838
    %vm846 = vmor %vm844, %vm845
    %v847 = vsel %vm846, %v838, %v843
    %v848 = vrsqrt.pop %v805
    %v849 = vmul.f32 %v848, %v805
    %v850 = vmul.f32 %v849, %v848
    %v851 = vmul.f32 0.5, %v850
    %v852 = vsub.f32 1.5, %v851
    %v853 = vmul.f32 %v848, %v852
    %vm854 = vweird.f32 %v805
    %vm855 = vweird.f32 %v848
    %vm856 = vmor %vm854, %vm855
    %v857 = vsel %vm856, %v848, %v853
    %v858 = vrsqrt.pop %v806
    %v859 = vmul.f32 %v858, %v806
    %v860 = vmul.f32 %v859, %v858
    %v861 = vmul.f32 0.5, %v860
    %v862 = vsub.f32 1.5, %v861
    %v863 = vmul.f32 %v858, %v862
    %vm864 = vweird.f32 %v806
    %vm865 = vweird.f32 %v858
    %vm866 = vmor %vm864, %vm865
    %v867 = vsel %vm866, %v858, %v863
    %v868 = vrsqrt.pop %v807
    %v869 = vmul.f32 %v868, %v807
    %v870 = vmul.f32 %v869, %v868
    %v871 = vmul.f32 0.5, %v870
    %v872 = vsub.f32 1.5, %v871
    %v873 = vmul.f32 %v868, %v872
    %vm874 = vweird.f32 %v807
    %vm875 = vweird.f32 %v868
    %vm876 = vmor %vm874, %vm875
    %v877 = vsel %vm876, %v868, %v873
    %v878 = vrsqrt.pop %v808
    %v879 = vmul.f32 %v878, %v808
    %v880 = vmul.f32 %v879, %v878
    %v881 = vmul.f32 0.5, %v880
    %v882 = vsub.f32 1.5, %v881
    %v883 = vmul.f32 %v878, %v882
    %vm884 = vweird.f32 %v808
    %vm885 = vweird.f32 %v878
    %vm886 = vmor %vm884, %vm885
    %v887 = vsel %vm886, %v878, %v883
    %v888 = vrsqrt.pop %v809
    %v889 = vmul.f32 %v888, %v809
    %v890 = vmul.f32 %v889, %v888
    %v891 = vmul.f32 0.5, %v890
    %v892 = vsub.f32 1.5, %v891
    %v893 = vmul.f32 %v888, %v892
    %vm894 = vweird.f32 %v809
    %vm895 = vweird.f32 %v888
    %vm896 = vmor %vm894, %vm895
    %v897 = vsel %vm896, %v888, %v893
    %v898 = vrsqrt.pop %v810
    %v899 = vmul.f32 %v898, %v810
    %v900 = vmul.f32 %v899, %v898
    %v901 = vmul.f32 0.5, %v900
    %v902 = vsub.f32 1.5, %v901
    %v903 = vmul.f32 %v898, %v902
    %vm904 = vweird.f32 %v810
    %vm905 = vweird.f32 %v898
    %vm906 = vmor %vm904, %vm905
    %v907 = vsel %vm906, %v898, %v903
    %v908 = vrsqrt.pop %v811
    %v909 = vmul.f32 %v908, %v811
    %v910 = vmul.f32 %v909, %v908
    %v911 = vmul.f32 0.5, %v910
    %v912 = vsub.f32 1.5, %v911
    %v913 = vmul.f32 %v908, %v912
    %vm914 = vweird.f32 %v811
    %vm915 = vweird.f32 %v908
    %vm916 = vmor %vm914, %vm915
    %v917 = vsel %vm916, %v908, %v913
    %v918 = vrsqrt.pop %v812
    %v919 = vmul.f32 %v918, %v812
    %v920 = vmul.f32 %v919, %v918
    %v921 = vmul.f32 0.5, %v920
    %v922 = vsub.f32 1.5, %v921
    %v923 = vmul.f32 %v918, %v922
    %vm924 = vweird.f32 %v812
    %vm925 = vweird.f32 %v918
    %vm926 = vmor %vm924, %vm925
    %v927 = vsel %vm926, %v918, %v923
    %v928 = vrsqrt.pop %v813
    %v929 = vmul.f32 %v928, %v813
    %v930 = vmul.f32 %v929, %v928
    %v931 = vmul.f32 0.5, %v930
    %v932 = vsub.f32 1.5, %v931
    %v933 = vmul.f32 %v928, %v932
    %vm934 = vweird.f32 %v813
    %vm935 = vweird.f32 %v928
    %vm936 = vmor %vm934, %vm935
    %v937 = vsel %vm936, %v928, %v933
    %v938 = vrsqrt.pop %v814
    %v939 = vmul.f32 %v938, %v814
    %v940 = vmul.f32 %v939, %v938
    %v941 = vmul.f32 0.5, %v940
    %v942 = vsub.f32 1.5, %v941
    %v943 = vmul.f32 %v938, %v942
    %vm944 = vweird.f32 %v814
    %vm945 = vweird.f32 %v938
    %vm946 = vmor %vm944, %vm945
    %v947 = vsel %vm946, %v938, %v943
    %v948 = vrsqrt.pop %v815
    %v949 = vmul.f32 %v948, %v815
    %v950 = vmul.f32 %v949, %v948
    %v951 = vmul.f32 0.5, %v950
    %v952 = vsub.f32 1.5, %v951
    %v953 = vmul.f32 %v948, %v952
    %vm954 = vweird.f32 %v815
    %vm955 = vweird.f32 %v948
    %vm956 = vmor %vm954, %vm955
    %v957 = vsel %vm956, %v948, %v953
    %v958 = vrsqrt.pop %v816
    %v959 = vmul.f32 %v958, %v816
    %v960 = vmul.f32 %v959, %v958
    %v961 = vmul.f32 0.5, %v960
    %v962 = vsub.f32 1.5, %v961
    %v963 = vmul.f32 %v958, %v962
    %vm964 = vweird.f32 %v816
    %vm965 = vweird.f32 %v958
    %vm966 = vmor %vm964, %vm965
    %v967 = vsel %vm966, %v958, %v963
    %v968 = vrsqrt.pop %v817
    %v969 = vmul.f32 %v968, %v817
    %v970 = vmul.f32 %v969, %v968
    %v971 = vmul.f32 0.5, %v970
    %v972 = vsub.f32 1.5, %v971
    %v973 = vmul.f32 %v968, %v972
    %vm974 = vweird.f32 %v817
    %vm975 = vweird.f32 %v968
    %vm976 = vmor %vm974, %vm975
    %v977 = vsel %vm976, %v968, %v973
    %v978 = vmul.f32 %v738, %v827
    %v979 = vmul.f32 %v739, %v837
    %v980 = vmul.f32 %v740, %v847
    %v981 = vmul.f32 %v741, %v857
    %v982 = vmul.f32 %v742, %v867
    %v983 = vmul.f32 %v743, %v877
    %v984 = vmul.f32 %v744, %v887
    %v985 = vmul.f32 %v745, %v897
    %v986 = vmul.f32 %v746, %v907
    %v987 = vmul.f32 %v747, %v917
    %v988 = vmul.f32 %v748, %v927
    %v989 = vmul.f32 %v749, %v937
    %v990 = vmul.f32 %v750, %v947
    %v991 = vmul.f32 %v751, %v957
    %v992 = vmul.f32 %v752, %v967
    %v993 = vmul.f32 %v753, %v977
    %v994 = vlaneseq
    %v995 = vshrl.u32 %v994, 7
    %v996 = vadd.s32 %v995, 8
    %v997 = vadd.s32 %v995, 16
    %v998 = vadd.s32 %v995, 24
    %v999 = vadd.s32 %v995, 32
    %v1000 = vadd.s32 %v995, 40
    %v1001 = vadd.s32 %v995, 48
    %v1002 = vadd.s32 %v995, 56
    %v1003 = vadd.s32 %v995, 64
    %v1004 = vadd.s32 %v995, 72
    %v1005 = vadd.s32 %v995, 80
    %v1006 = vadd.s32 %v995, 88
    %v1007 = vadd.s32 %v995, 96
    %v1008 = vadd.s32 %v995, 104
    %v1009 = vadd.s32 %v995, 112
    %v1010 = vadd.s32 %v995, 120
    %v1011 = vstv %s33
    %vm1012 = vcmp.lt.s32.totalorder %v995, %v1011
    %vm1013 = vcmp.lt.s32.totalorder %v996, %v1011
    %vm1014 = vcmp.lt.s32.totalorder %v997, %v1011
    %vm1015 = vcmp.lt.s32.totalorder %v998, %v1011
    %vm1016 = vcmp.lt.s32.totalorder %v999, %v1011
    %vm1017 = vcmp.lt.s32.totalorder %v1000, %v1011
    %vm1018 = vcmp.lt.s32.totalorder %v1001, %v1011
    %vm1019 = vcmp.lt.s32.totalorder %v1002, %v1011
    %vm1020 = vcmp.lt.s32.totalorder %v1003, %v1011
    %vm1021 = vcmp.lt.s32.totalorder %v1004, %v1011
    %vm1022 = vcmp.lt.s32.totalorder %v1005, %v1011
    %vm1023 = vcmp.lt.s32.totalorder %v1006, %v1011
    %vm1024 = vcmp.lt.s32.totalorder %v1007, %v1011
    %vm1025 = vcmp.lt.s32.totalorder %v1008, %v1011
    %vm1026 = vcmp.lt.s32.totalorder %v1009, %v1011
    %vm1027 = vcmp.lt.s32.totalorder %v1010, %v1011
    %v1028 = vsel %vm1012, 1, 0
    %v1029 = vsel %vm1013, 1, 0
    %v1030 = vsel %vm1014, 1, 0
    %v1031 = vsel %vm1015, 1, 0
    %v1032 = vsel %vm1016, 1, 0
    %v1033 = vsel %vm1017, 1, 0
    %v1034 = vsel %vm1018, 1, 0
    %v1035 = vsel %vm1019, 1, 0
    %v1036 = vsel %vm1020, 1, 0
    %v1037 = vsel %vm1021, 1, 0
    %v1038 = vsel %vm1022, 1, 0
    %v1039 = vsel %vm1023, 1, 0
    %v1040 = vsel %vm1024, 1, 0
    %v1041 = vsel %vm1025, 1, 0
    %v1042 = vsel %vm1026, 1, 0
    %v1043 = vsel %vm1027, 1, 0
    %vm1044 = vcmp.eq.s32.totalorder %v1028, 1
    %vm1045 = vcmp.eq.s32.totalorder %v1029, 1
    %vm1046 = vcmp.eq.s32.totalorder %v1030, 1
    %vm1047 = vcmp.eq.s32.totalorder %v1031, 1
    %vm1048 = vcmp.eq.s32.totalorder %v1032, 1
    %vm1049 = vcmp.eq.s32.totalorder %v1033, 1
    %vm1050 = vcmp.eq.s32.totalorder %v1034, 1
    %vm1051 = vcmp.eq.s32.totalorder %v1035, 1
    %vm1052 = vcmp.eq.s32.totalorder %v1036, 1
    %vm1053 = vcmp.eq.s32.totalorder %v1037, 1
    %vm1054 = vcmp.eq.s32.totalorder %v1038, 1
    %vm1055 = vcmp.eq.s32.totalorder %v1039, 1
    %vm1056 = vcmp.eq.s32.totalorder %v1040, 1
    %vm1057 = vcmp.eq.s32.totalorder %v1041, 1
    %vm1058 = vcmp.eq.s32.totalorder %v1042, 1
    %vm1059 = vcmp.eq.s32.totalorder %v1043, 1
    %v1060 = vsel %vm1044, %v978, 0.0
    %v1061 = vsel %vm1045, %v979, 0.0
    %v1062 = vsel %vm1046, %v980, 0.0
    %v1063 = vsel %vm1047, %v981, 0.0
    %v1064 = vsel %vm1048, %v982, 0.0
    %v1065 = vsel %vm1049, %v983, 0.0
    %v1066 = vsel %vm1050, %v984, 0.0
    %v1067 = vsel %vm1051, %v985, 0.0
    %v1068 = vsel %vm1052, %v986, 0.0
    %v1069 = vsel %vm1053, %v987, 0.0
    %v1070 = vsel %vm1054, %v988, 0.0
    %v1071 = vsel %vm1055, %v989, 0.0
    %v1072 = vsel %vm1056, %v990, 0.0
    %v1073 = vsel %vm1057, %v991, 0.0
    %v1074 = vsel %vm1058, %v992, 0.0
    %v1075 = vsel %vm1059, %v993, 0.0
    %v1076 = vpack.c.bf16 %v1060, %v1060
    %v1077 = vpack.c.bf16 %v1061, %v1061
    %v1078 = vpack.c.bf16 %v1062, %v1062
    %v1079 = vpack.c.bf16 %v1063, %v1063
    %v1080 = vpack.c.bf16 %v1064, %v1064
    %v1081 = vpack.c.bf16 %v1065, %v1065
    %v1082 = vpack.c.bf16 %v1066, %v1066
    %v1083 = vpack.c.bf16 %v1067, %v1067
    %v1084 = vpack.c.bf16 %v1068, %v1068
    %v1085 = vpack.c.bf16 %v1069, %v1069
    %v1086 = vpack.c.bf16 %v1070, %v1070
    %v1087 = vpack.c.bf16 %v1071, %v1071
    %v1088 = vpack.c.bf16 %v1072, %v1072
    %v1089 = vpack.c.bf16 %v1073, %v1073
    %v1090 = vpack.c.bf16 %v1074, %v1074
    %v1091 = vpack.c.bf16 %v1075, %v1075
    %1092 = vst [vmem:[#allocation7] sm:$0xf] %v1076
    %1093 = vst [vmem:[#allocation7 + $0x4] sm:$0xf] %v1077
    %1094 = vst [vmem:[#allocation7 + $0x8] sm:$0xf] %v1078
    %1095 = vst [vmem:[#allocation7 + $0xc] sm:$0xf] %v1079
    %1096 = vst [vmem:[#allocation7 + $0x10] sm:$0xf] %v1080
    %1097 = vst [vmem:[#allocation7 + $0x14] sm:$0xf] %v1081
    %1098 = vst [vmem:[#allocation7 + $0x18] sm:$0xf] %v1082
    %1099 = vst [vmem:[#allocation7 + $0x1c] sm:$0xf] %v1083
    %1100 = vst [vmem:[#allocation7 + $0x20] sm:$0xf] %v1084
    %1101 = vst [vmem:[#allocation7 + $0x24] sm:$0xf] %v1085
    %1102 = vst [vmem:[#allocation7 + $0x28] sm:$0xf] %v1086
    %1103 = vst [vmem:[#allocation7 + $0x2c] sm:$0xf] %v1087
    %1104 = vst [vmem:[#allocation7 + $0x30] sm:$0xf] %v1088
    %1105 = vst [vmem:[#allocation7 + $0x34] sm:$0xf] %v1089
    %1106 = vst [vmem:[#allocation7 + $0x38] sm:$0xf] %v1090
    %1107 = vst [vmem:[#allocation7 + $0x3c] sm:$0xf] %v1091
    // Predicated region
    $region18: #{tpu_custom_call.1} parent=1 // pred_check
      _
    $region19: #{tpu_custom_call.1} parent=1 // pred_check_branch
      %1109 = sbr.rel (0) target = $region21
    $region20: #{tpu_custom_call.1} parent=1 // pred_region
      %1111 = vsyncadd [#allocation6], 0
      %s1112 = sshll.u32 [#allocation7], 4
      %s1113 = int_to_ptr.vmem [resolvable:$true] %s1112
      %s1114 = sshll.u32 %s4, 4
      %s1115 = int_to_ptr.hbm [resolvable:$true] %s1114
      %1120 = dma.vmem_to_hbm [thread:$0]  %s1113, 1024, %s1115, [#allocation6], 64, 64, 4
    $region21: #{tpu_custom_call.1} parent=1 // pred_fallthru
      _
    // Predicated region
    $region22: #{tpu_custom_call.1} parent=1 // pred_check
      _
    $region23: #{tpu_custom_call.1} parent=1 // pred_check_branch
      %1122 = sbr.rel (0) target = $region25
    $region24: #{tpu_custom_call.1} parent=1 // pred_region
      %1124 = dma.done [#allocation6], 1024
    $region25: #{tpu_custom_call.1} parent=1 // pred_fallthru
      _
    %1125 = vsyncpa [#allocation5], 1
    %1126 = vsyncpa [#allocation6], 1

</llo_original>
